<compile_context>
chip_gen: v7x
topology: tpu7x:2x2x1
jax: 0.10.0
libtpu: 0.0.40
codegen_flags: <defaults>
</compile_context>

<pallas_src>
import functools

import jax
import jax.numpy as jnp
from jax import lax
from jax.experimental import pallas as pl
from jax.experimental.pallas import tpu as pltpu


def _focal_loss_kernel(logits_ref, target_ref, out_ref, acc_ref, *,
                       gamma, n_total, needs_mask):
    """One (TN, C) row-tile: accumulate -sum(focal logpt at target) into a VMEM
    scratch; write the mean to the (1,1) output on the final grid step."""
    i = pl.program_id(0)

    @pl.when(i == 0)
    def _():
        acc_ref[...] = jnp.zeros_like(acc_ref)

    x = logits_ref[...].astype(jnp.float32)           # (TN, C)
    tgt = target_ref[...]                             # (TN, 1) int32
    tn, c = x.shape

    # numerically-stable softmax pieces — the ONLY full-tile transcendental
    m = jnp.max(x, axis=1, keepdims=True)             # (TN, 1)
    z = x - m
    ez = jnp.exp(z)                                   # (TN, C)
    sum_ez = jnp.sum(ez, axis=1, keepdims=True)       # (TN, 1)
    lse = jnp.log(sum_ez)                             # (TN, 1)

    # gather the target column first; everything below is (TN, 1) work
    col = lax.broadcasted_iota(jnp.int32, (tn, c), 1)
    onehot = col == tgt
    z_t = jnp.sum(jnp.where(onehot, z, 0.0), axis=1, keepdims=True)
    ez_t = jnp.sum(jnp.where(onehot, ez, 0.0), axis=1, keepdims=True)

    logpt_t = z_t - lse                               # log_softmax at target
    pt_t = ez_t / sum_ez                              # exp(logpt_t), reusing ez
    u = 1.0 - pt_t
    if float(gamma) == int(gamma):
        fw = lax.integer_pow(u, int(gamma))           # gamma=2 -> u*u (VPU)
    else:
        fw = u ** gamma                               # only (TN, 1) elements
    focal_t = fw * logpt_t                            # (TN, 1)

    if needs_mask:
        row = lax.broadcasted_iota(jnp.int32, (tn, 1), 0) + i * tn
        focal_t = jnp.where(row < n_total, focal_t, 0.0)

    acc_ref[...] += -jnp.sum(focal_t, keepdims=True)  # (1, 1) partial

    @pl.when(i == pl.num_programs(0) - 1)
    def _():
        out_ref[...] = acc_ref[...] * (1.0 / n_total)  # reduction='mean'


def _choose_block_n(n, c):
    """Largest row-tile that keeps the double-buffered pipeline well under the
    smallest default scoped-VMEM limit across v5e/v6e/v7x."""
    budget_bytes = 8 * 1024 * 1024                    # per logits buffer
    c_pad = max(128, ((c + 127) // 128) * 128)        # lanes pad to 128 in VMEM
    rows = budget_bytes // (c_pad * 4)
    rows = max(8, min(2048, rows))
    rows = (rows // 8) * 8                            # sublane alignment
    n_pad8 = ((n + 7) // 8) * 8
    return max(8, min(rows, n_pad8))


def focal_loss(logits, target, gamma=2.0, block_n=None):
    """logits: (N, C) float; target: (N,) int class indices. Returns scalar loss."""
    n, c = logits.shape
    if block_n is None:
        block_n = _choose_block_n(n, c)
    n_tiles = -(-n // block_n)
    n_pad = n_tiles * block_n
    if n_pad != n:
        logits = jnp.pad(logits, ((0, n_pad - n), (0, 0)))
        target = jnp.pad(target, (0, n_pad - n))
    target2d = target.astype(jnp.int32).reshape(n_pad, 1)

    kernel = functools.partial(
        _focal_loss_kernel,
        gamma=float(gamma),
        n_total=int(n),
        needs_mask=(n_pad != n),
    )
    out = pl.pallas_call(
        kernel,
        out_shape=jax.ShapeDtypeStruct((1, 1), jnp.float32),
        grid=(n_tiles,),
        in_specs=[
            pl.BlockSpec((block_n, c), lambda i: (i, 0)),   # row-tile of logits
            pl.BlockSpec((block_n, 1), lambda i: (i, 0)),   # matching targets
        ],
        out_specs=pl.BlockSpec((1, 1), lambda i: (0, 0)),   # written once at end
        scratch_shapes=[pltpu.VMEM((1, 1), jnp.float32)],   # running accumulator
        compiler_params=pltpu.CompilerParams(
            dimension_semantics=("arbitrary",),             # grid axis is a reduction
            vmem_limit_bytes=32 * 1024 * 1024,
        ),
    )(logits, target2d)
    return out[0, 0]


def _focal_loss_ref(logits, target, gamma=2.0):
    logpt = jax.nn.log_softmax(logits.astype(jnp.float32), axis=1)
    pt = jnp.exp(logpt)
    focal = (1.0 - pt) ** gamma * logpt
    picked = jnp.take_along_axis(focal, target[:, None].astype(jnp.int32), axis=1)[:, 0]
    return -jnp.mean(picked)


if __name__ == "__main__":
    key = jax.random.PRNGKey(0)
    k1, k2, k3, k4 = jax.random.split(key, 4)

    # batch=16, classes=10 classification head (module's 2-D (N, C) input)
    N, C = 16, 10
    logits = jax.random.normal(k1, (N, C), dtype=jnp.float32)
    target = jax.random.randint(k2, (N,), 0, C, dtype=jnp.int32)

    loss = jax.block_until_ready(focal_loss(logits, target, gamma=2.0))
    ref = _focal_loss_ref(logits, target, gamma=2.0)
    assert jnp.allclose(loss, ref, atol=1e-5, rtol=1e-5), (loss, ref)

    # batch not divisible by the block -> exercises the padded-row masking path
    N2 = 13
    logits2 = jax.random.normal(k3, (N2, C), dtype=jnp.float32)
    target2 = jax.random.randint(k4, (N2,), 0, C, dtype=jnp.int32)
    loss2 = jax.block_until_ready(focal_loss(logits2, target2, gamma=2.0))
    ref2 = _focal_loss_ref(logits2, target2, gamma=2.0)
    assert jnp.allclose(loss2, ref2, atol=1e-5, rtol=1e-5), (loss2, ref2)

    print("KERNEL_OK")
</pallas_src>

<mosaic_0001>
module attributes {stable_mosaic.version = 11 : i64} {
  func.func @_focal_loss_kernel(%arg0: i32, %arg1: memref<16x10xf32, #tpu.memory_space<vmem>>, %arg2: memref<16x1xi32, #tpu.memory_space<vmem>>, %arg3: memref<1x1xf32, #tpu.memory_space<vmem>>, %arg4: memref<1x1xf32, #tpu.memory_space<vmem>>) attributes {dimension_semantics = [#tpu.dimension_semantics<arbitrary>], iteration_bounds = array<i64: 1>, scalar_prefetch = 0 : i64, scratch_operands = 1 : i64, tpu.core_type = #tpu.core_type<tc>, window_params = [{transform_indices = @transform_0, window_bounds = array<i64: 16, 10>}, {transform_indices = @transform_1, window_bounds = array<i64: 16, 1>}, {pipeline_mode = #tpu.pipeline_mode<synchronous>, transform_indices = @transform_2, window_bounds = array<i64: 1, 1>}]} {
    %c0_i32 = arith.constant 0 : i32
    %0 = arith.cmpi eq, %arg0, %c0_i32 : i32
    %1 = arith.extui %0 : i1 to i32
    %c0_i32_0 = arith.constant 0 : i32
    %2 = arith.cmpi ne, %1, %c0_i32_0 : i32
    scf.if %2 {
      %cst_18 = arith.constant 0.000000e+00 : f32
      %43 = vector.broadcast %cst_18 : f32 to vector<1x1xf32>
      %c0_19 = arith.constant 0 : index
      %c0_20 = arith.constant 0 : index
      %44 = vector.load %arg4[%c0_19, %c0_20] : memref<1x1xf32, #tpu.memory_space<vmem>>, vector<1x1xf32>
      tpu.vector_store %arg4[%c0_19, %c0_20], %43 {strides = array<i32>} : memref<1x1xf32, #tpu.memory_space<vmem>>, vector<1x1xf32>,
    } else {
    }
    %c0 = arith.constant 0 : index
    %c0_1 = arith.constant 0 : index
    %3 = vector.load %arg1[%c0, %c0_1] : memref<16x10xf32, #tpu.memory_space<vmem>>, vector<16x10xf32>
    %c0_2 = arith.constant 0 : index
    %c0_3 = arith.constant 0 : index
    %4 = vector.load %arg2[%c0_2, %c0_3] : memref<16x1xi32, #tpu.memory_space<vmem>>, vector<16x1xi32>
    %cst = arith.constant dense<0xFF800000> : vector<16xf32>
    %5 = vector.multi_reduction <maximumf>, %3, %cst [1] : vector<16x10xf32> to vector<16xf32>
    %6 = vector.shape_cast %5 : vector<16xf32> to vector<16x1xf32>
    %7 = vector.broadcast %6 : vector<16x1xf32> to vector<16x10xf32>
    %8 = arith.subf %3, %7 : vector<16x10xf32>
    %9 = math.exp %8 : vector<16x10xf32>
    %cst_4 = arith.constant dense<0.000000e+00> : vector<16xf32>
    %10 = vector.multi_reduction <add>, %9, %cst_4 [1] : vector<16x10xf32> to vector<16xf32>
    %11 = vector.shape_cast %10 : vector<16xf32> to vector<16x1xf32>
    %12 = math.log %11 : vector<16x1xf32>
    %13 = tpu.iota {dimensions = array<i32: 1>} : vector<16x10xi32>
    %14 = vector.broadcast %4 : vector<16x1xi32> to vector<16x10xi32>
    %15 = arith.cmpi eq, %13, %14 : vector<16x10xi32>
    %cst_5 = arith.constant 0.000000e+00 : f32
    %16 = vector.broadcast %cst_5 : f32 to vector<16x10xf32>
    %17 = arith.select %15, %8, %16 : vector<16x10xi1>, vector<16x10xf32>
    %cst_6 = arith.constant dense<0.000000e+00> : vector<16xf32>
    %18 = vector.multi_reduction <add>, %17, %cst_6 [1] : vector<16x10xf32> to vector<16xf32>
    %19 = vector.shape_cast %18 : vector<16xf32> to vector<16x1xf32>
    %cst_7 = arith.constant 0.000000e+00 : f32
    %20 = vector.broadcast %cst_7 : f32 to vector<16x10xf32>
    %21 = arith.select %15, %9, %20 : vector<16x10xi1>, vector<16x10xf32>
    %cst_8 = arith.constant dense<0.000000e+00> : vector<16xf32>
    %22 = vector.multi_reduction <add>, %21, %cst_8 [1] : vector<16x10xf32> to vector<16xf32>
    %23 = vector.shape_cast %22 : vector<16xf32> to vector<16x1xf32>
    %24 = arith.subf %19, %12 : vector<16x1xf32>
    %25 = arith.divf %23, %11 : vector<16x1xf32>
    %cst_9 = arith.constant 1.000000e+00 : f32
    %26 = vector.broadcast %cst_9 : f32 to vector<16x1xf32>
    %27 = arith.subf %26, %25 : vector<16x1xf32>
    %28 = arith.mulf %27, %27 : vector<16x1xf32>
    %29 = arith.mulf %28, %24 : vector<16x1xf32>
    %c0_10 = arith.constant 0 : index
    %c0_11 = arith.constant 0 : index
    %30 = vector.load %arg4[%c0_10, %c0_11] : memref<1x1xf32, #tpu.memory_space<vmem>>, vector<1x1xf32>
    %31 = vector.shape_cast %29 : vector<16x1xf32> to vector<1x16x1xf32>
    %cst_12 = arith.constant dense<0.000000e+00> : vector<1xf32>
    %32 = vector.multi_reduction <add>, %31, %cst_12 [1, 2] : vector<1x16x1xf32> to vector<1xf32>
    %33 = vector.shape_cast %32 : vector<1xf32> to vector<1x1x1xf32>
    %34 = vector.extract %33[0, 0, 0] : f32 from vector<1x1x1xf32>
    %35 = vector.broadcast %34 : f32 to vector<1x1xf32>
    %cst_13 = arith.constant 0.000000e+00 : f32
    %36 = vector.broadcast %cst_13 : f32 to vector<1x1xf32>
    %37 = arith.subf %36, %35 : vector<1x1xf32>
    %38 = arith.addf %30, %37 : vector<1x1xf32>
    %c0_14 = arith.constant 0 : index
    %c0_15 = arith.constant 0 : index
    %39 = vector.load %arg4[%c0_14, %c0_15] : memref<1x1xf32, #tpu.memory_space<vmem>>, vector<1x1xf32>
    tpu.vector_store %arg4[%c0_14, %c0_15], %38 {strides = array<i32>} : memref<1x1xf32, #tpu.memory_space<vmem>>, vector<1x1xf32>,
    %c0_i32_16 = arith.constant 0 : i32
    %40 = arith.cmpi eq, %arg0, %c0_i32_16 : i32
    %41 = arith.extui %40 : i1 to i32
    %c0_i32_17 = arith.constant 0 : i32
    %42 = arith.cmpi ne, %41, %c0_i32_17 : i32
    scf.if %42 {
      %c0_18 = arith.constant 0 : index
      %c0_19 = arith.constant 0 : index
      %43 = vector.load %arg4[%c0_18, %c0_19] : memref<1x1xf32, #tpu.memory_space<vmem>>, vector<1x1xf32>
      %cst_20 = arith.constant 6.250000e-02 : f32
      %44 = vector.broadcast %cst_20 : f32 to vector<1x1xf32>
      %45 = arith.mulf %43, %44 : vector<1x1xf32>
      %c0_21 = arith.constant 0 : index
      %c0_22 = arith.constant 0 : index
      %46 = vector.load %arg3[%c0_21, %c0_22] : memref<1x1xf32, #tpu.memory_space<vmem>>, vector<1x1xf32>
      tpu.vector_store %arg3[%c0_21, %c0_22], %45 {strides = array<i32>} : memref<1x1xf32, #tpu.memory_space<vmem>>, vector<1x1xf32>,
    } else {
    }
    return
  }
  func.func @transform_0(%arg0: i32) -> (i32, i32) {
    %c0_i32 = arith.constant 0 : i32
    %c0_i32_0 = arith.constant 0 : i32
    return %arg0, %c0_i32 : i32, i32
  }
  func.func @transform_1(%arg0: i32) -> (i32, i32) {
    %c0_i32 = arith.constant 0 : i32
    %c0_i32_0 = arith.constant 0 : i32
    return %arg0, %c0_i32 : i32, i32
  }
  func.func @transform_2(%arg0: i32) -> (i32, i32) {
    %c0_i32 = arith.constant 0 : i32
    %c0_i32_0 = arith.constant 0 : i32
    %c0_i32_1 = arith.constant 0 : i32
    return %c0_i32, %c0_i32_0 : i32, i32
  }
}

</mosaic_0001>

<llo_original>
// kernel: tpu_custom_call.1
$region0: #{tpu_custom_call.1}
  #allocation0 [shape = 'u32[]', space=smem, size = 0x4, offset = 0x4, fixed_abs, tag = 'smem constant byte address 0x4 - core index']
  #allocation1 [shape = 'u32[144,128]{1,0:T(1,128)}', space=vmem, size = 0x12000, scoped, tag = 'internal scratch']
  #allocation2 [shape = 'f32[1,1]{1,0:T(1,128)}', space=vmem, size = 0x200, scoped, tag = 'scratch operand']
  %s0 = inlined_call_operand.vmem [shape: f32[16,10], index: 0, kind: input, shape index: {}]
  %s1 = inlined_call_operand.vmem [shape: s32[16,1], index: 1, kind: input, shape index: {}]
  %s2 = inlined_call_operand.hbm [shape: f32[1,1], index: 2, kind: output, shape index: {}]
  %s3 = sld [smem:[#allocation0]]
  $region26: #{tpu_custom_call.1} parent=0
    _
  %s5 = ssub.s32 1, %s3
  %s6 = scalar_select 0, %s5, %s3
  $region1: #{tpu_custom_call.1} parent=0
    #allocation3 [shape = 'u8[512]{0}', space=vmem, size = 0x400, scoped, tag = 'output window, operand 0, single buffered']
    #allocation4 [shape = 's32[1]{0}', space=sflag, size = 0x4, scoped, tag = 'scoped memory for tpu_custom_call.1']
    %7 = vsyncpa [#allocation4], 0
    // Predicated region
    $region2: #{tpu_custom_call.1} parent=1 // pred_check
      _
    $region3: #{tpu_custom_call.1} parent=1 // pred_check_branch
      %9 = sbr.rel (0) target = $region5
    $region4: #{tpu_custom_call.1} parent=1 // pred_region
      _
    $region5: #{tpu_custom_call.1} parent=1 // pred_fallthru
      _
    // Predicated region
    $region6: #{tpu_custom_call.1} parent=1 // pred_check
      _
    $region7: #{tpu_custom_call.1} parent=1 // pred_check_branch
      %11 = sbr.rel (0) target = $region9
    $region8: #{tpu_custom_call.1} parent=1 // pred_region
      _
    $region9: #{tpu_custom_call.1} parent=1 // pred_fallthru
      _
    %p12 = scmp.eq.s32.totalorder 0, 0
    // Predicated region
    $region10: #{tpu_custom_call.1} parent=1 // pred_check
      %p13 = pneg %p12
    $region11: #{tpu_custom_call.1} parent=1 // pred_check_branch
      %15 = sbr.rel (%p13) target = $region13
    $region12: #{tpu_custom_call.1} parent=1 // pred_region
      %vm16 = vcmask 0
      %17 = vst.msk [vmem:[#allocation2] sm:$0x1] %vm16, 0.0
    $region13: #{tpu_custom_call.1} parent=1 // pred_fallthru
      _
    %v18 = vld [vmem:[%s0] sm:$0xff]
    %v19 = vld [vmem:[%s0 + $0x8] sm:$0xff]
    %v20 = vld [vmem:[%s1] sm:$0xff]
    %v21 = vld [vmem:[%s1 + $0x8] sm:$0xff]
    %vm22 = vcmask 80896
    %v23 = vsel %vm22, %v18, -inf
    %24 = vmax.xlane.f32.xlu0 %v23
    %v25 = vpop.xlane.xlu0 %24
    %v26 = vsel %vm22, %v19, -inf
    %27 = vmax.xlane.f32.xlu0 %v26
    %v28 = vpop.xlane.xlu0 %27
    %v29 = vsub.f32 %v18, %v25
    %v30 = vsub.f32 %v19, %v28
    %v31 = vmul.f32 %v29, 1.442695
    %v32 = vpow.pop %v31
    %v33 = vmul.f32 %v30, 1.442695
    %v34 = vpow.pop %v33
    %v35 = vsel %vm22, %v32, 0.0
    %36 = vadd.xlane.f32.xlu0 %v35
    %v37 = vpop.xlane.xlu0 %36
    %v38 = vsel %vm22, %v34, 0.0
    %39 = vadd.xlane.f32.xlu0 %v38
    %v40 = vpop.xlane.xlu0 %39
    %v41 = vlog2.pop %v37
    %v42 = vmul.f32 %v41, 0.6931472
    %v43 = vlog2.pop %v40
    %v44 = vmul.f32 %v43, 0.6931472
    %v45 = vlaneseq
    %v46 = vand.u32 %v45, 127
    %47 = vset.pattern.permute.xlu0 0
    %48 = vperm.xlu0 %47, %v20
    %v49 = vpop.permute.xlu0 %48
    %50 = vset.pattern.permute.xlu0 0
    %51 = vperm.xlu0 %50, %v21
    %v52 = vpop.permute.xlu0 %51
    %vm53 = vcmp.eq.s32.totalorder %v46, %v49
    %vm54 = vcmp.eq.s32.totalorder %v46, %v52
    %v55 = vsel %vm53, %v29, 0.0
    %v56 = vsel %vm54, %v30, 0.0
    %v57 = vsel %vm22, %v55, 0.0
    %58 = vadd.xlane.f32.xlu0 %v57
    %v59 = vpop.xlane.xlu0 %58
    %v60 = vsel %vm22, %v56, 0.0
    %61 = vadd.xlane.f32.xlu0 %v60
    %v62 = vpop.xlane.xlu0 %61
    %v63 = vsel %vm53, %v32, 0.0
    %v64 = vsel %vm54, %v34, 0.0
    %v65 = vsel %vm22, %v63, 0.0
    %66 = vadd.xlane.f32.xlu0 %v65
    %v67 = vpop.xlane.xlu0 %66
    %v68 = vsel %vm22, %v64, 0.0
    %69 = vadd.xlane.f32.xlu0 %v68
    %v70 = vpop.xlane.xlu0 %69
    %v71 = vsub.f32 %v59, %v42
    %v72 = vsub.f32 %v62, %v44
    %v73 = vrcp.pop %v37
    %v74 = vmul.f32 %v67, %v73
    %v75 = vrcp.pop %v40
    %v76 = vmul.f32 %v70, %v75
    %v77 = vsub.f32 1.0, %v74
    %v78 = vsub.f32 1.0, %v76
    %v79 = vmul.f32 %v77, %v77
    %v80 = vmul.f32 %v78, %v78
    %v81 = vmul.f32 %v79, %v71
    %v82 = vmul.f32 %v80, %v72
    %v83 = vld [vmem:[#allocation2] sm:$0x1]
    %vm84 = vcmask 7168
    %v85 = vsel %vm84, %v81, 0.0
    %v86 = vsel %vm84, %v82, 0.0
    %v87 = vadd.f32 %v85, %v86
    %88 = vadd.xlane.f32.xlu0 %v87
    %v89 = vpop.xlane.xlu0 %88
    %v90 = vrot.slane %v89, 4
    %v91 = vadd.f32 %v89, %v90
    %v92 = vrot.slane %v91, 2
    %v93 = vadd.f32 %v91, %v92
    %v94 = vrot.slane %v93, 1
    %v95 = vadd.f32 %v93, %v94
    %s96 = vtos %v95
    %v97 = vstv %s96
    %v98 = vsub.f32 0.0, %v97
    %v99 = vadd.f32 %v83, %v98
    %vm100 = vcmask 0
    %101 = vst.msk [vmem:[#allocation2] sm:$0x1] %vm100, %v99
    // Predicated region
    $region14: #{tpu_custom_call.1} parent=1 // pred_check
      %p102 = pneg %p12
    $region15: #{tpu_custom_call.1} parent=1 // pred_check_branch
      %104 = sbr.rel (%p102) target = $region17
    $region16: #{tpu_custom_call.1} parent=1 // pred_region
      %v105 = vld [vmem:[#allocation2] sm:$0x1]
      %v106 = vmul.f32 %v105, 0.0625
      %107 = vst.msk [vmem:[#allocation3] sm:$0x1] %vm100, %v106
    $region17: #{tpu_custom_call.1} parent=1 // pred_fallthru
      _
    // Predicated region
    $region18: #{tpu_custom_call.1} parent=1 // pred_check
      _
    $region19: #{tpu_custom_call.1} parent=1 // pred_check_branch
      %109 = sbr.rel (0) target = $region21
    $region20: #{tpu_custom_call.1} parent=1 // pred_region
      %s111 = ssub.s32 16, 16
      %112 = vsyncadd [#allocation4], %s111
      %s114 = sshll.u32 [#allocation3], 4
      %s115 = int_to_ptr.vmem [resolvable:$true] %s114
      %117 = dma.vmem_to_hbm [thread:$0]  %s115, 16, %s2, [#allocation4]
    $region21: #{tpu_custom_call.1} parent=1 // pred_fallthru
      _
    // Predicated region
    $region22: #{tpu_custom_call.1} parent=1 // pred_check
      _
    $region23: #{tpu_custom_call.1} parent=1 // pred_check_branch
      %119 = sbr.rel (0) target = $region25
    $region24: #{tpu_custom_call.1} parent=1 // pred_region
      %120 = dma.done [#allocation4], 16
    $region25: #{tpu_custom_call.1} parent=1 // pred_fallthru
      _
    %121 = vsyncpa [#allocation4], 1

</llo_original>
